<compile_context>
chip_gen: v7x
topology: tpu7x:2x2x1
jax: 0.10.0
libtpu: 0.0.40
codegen_flags: <defaults>
</compile_context>

<pallas_src>
import jax
import jax.numpy as jnp
from jax.experimental import pallas as pl
from jax.experimental.pallas import tpu as pltpu


# ----------------------------- Pallas kernel ---------------------------------

def film_kernel(g_ref, b_ref, x_ref, o_ref):
    # g_ref/b_ref: (1, TC, 1) f32 (per-batch, per-channel-block modulation)
    # x_ref/o_ref: (1, TC, TM) feature tile, lanes = spatial (H*W)
    x = x_ref[0]                                   # (TC, TM)
    o_ref[0] = (g_ref[0] * x + b_ref[0]).astype(o_ref.dtype)


# ------------------------------ wrapper ---------------------------------------

def _vmem_capacity_bytes():
    try:
        return int(pltpu.get_tpu_info().vmem_capacity_bytes)
    except Exception:
        return 64 * 1024 * 1024        # conservative (v7x per-TC VMEM)


def film_forward(feature_map, text_feature, params, *, max_tile=32768):
    """FiLM forward.

    feature_map: (B, C, H, W) NCHW (f32 or bf16), text_feature: (B, text_dim).
    params: wg/wb: (C, text_dim) (nn.Linear weight layout), bg/bb: (C,).
    """
    B, C, H, W = feature_map.shape
    HW = H * W
    LANE, SUB = 128, 8
    itemsize = jnp.dtype(feature_map.dtype).itemsize

    # ---- gamma/beta once per batch in the wrapper (tiny fused matmul). -------
    w_cat = jnp.concatenate([params["wg"], params["wb"]], axis=0)        # (2C, text_dim)
    b_cat = jnp.concatenate([params["bg"], params["bb"]], axis=0)        # (2C,)
    gb = (text_feature.astype(jnp.float32) @ w_cat.T.astype(jnp.float32)
          + b_cat.astype(jnp.float32))                                   # (B, 2C)
    gamma = gb[:, :C].reshape(B, C, 1)
    beta = gb[:, C:].reshape(B, C, 1)

    # ---- channel-block size: full C when small, else multiple-of-8 blocks. ---
    TC = C if C <= 512 else 256

    # ---- lane-tile size: dtype- and generation-aware VMEM budget. ------------
    vmem_cap = _vmem_capacity_bytes()
    tile_budget = int(vmem_cap * 0.40)             # double-buffered x + out tiles
    # bytes per lane column per grid step: TC rows * (in + out) * double-buffer
    per_col = TC * itemsize * 2 * 2
    tm_cap = max(LANE, (tile_budget // per_col) // LANE * LANE)
    if HW <= min(max_tile, tm_cap):
        TM = HW                                    # full extent: always legal
    else:
        TM = int(min(max_tile, tm_cap)) // LANE * LANE
        TM = max(TM, LANE)

    # ---- lane-dense layout: channels on sublanes, H*W on lanes (free reshape).
    x3 = feature_map.reshape(B, C, HW)

    grid = (B, pl.cdiv(C, TC), pl.cdiv(HW, TM))    # ragged last blocks masked

    out3 = pl.pallas_call(
        film_kernel,
        out_shape=jax.ShapeDtypeStruct((B, C, HW), feature_map.dtype),
        grid_spec=pltpu.PrefetchScalarGridSpec(
            num_scalar_prefetch=0,
            grid=grid,
            in_specs=[
                pl.BlockSpec((1, TC, 1), lambda b, c, h: (b, c, 0)),   # gamma
                pl.BlockSpec((1, TC, 1), lambda b, c, h: (b, c, 0)),   # beta
                pl.BlockSpec((1, TC, TM), lambda b, c, h: (b, c, h)),  # x tile
            ],
            out_specs=pl.BlockSpec((1, TC, TM), lambda b, c, h: (b, c, h)),
        ),
        compiler_params=pltpu.CompilerParams(
            dimension_semantics=("parallel", "parallel", "parallel"),
            vmem_limit_bytes=int(vmem_cap * 0.70),
        ),
    )(gamma, beta, x3)

    # (B, C, HW) is already NCHW ordering -> plain reshape, no transpose.
    return out3.reshape(B, C, H, W)


# ------------------------- pure-JAX reference ---------------------------------

def ref_forward(feature_map, text_feature, params):
    gamma = text_feature @ params["wg"].T + params["bg"]
    beta = text_feature @ params["wb"].T + params["bb"]
    return (gamma[:, :, None, None] * feature_map + beta[:, :, None, None]
            ).astype(feature_map.dtype)


# --------------------------------- main ----------------------------------------

if __name__ == "__main__":
    B, C, H, W = 2, 32, 16, 16
    text_dim = 32

    key = jax.random.PRNGKey(0)
    k = jax.random.split(key, 6)

    # nn.Linear parameter shapes: weight (out_features, in_features), bias (out_features,)
    wg = 0.1 * jax.random.normal(k[0], (C, text_dim), jnp.float32)
    bg = 0.1 * jax.random.normal(k[1], (C,), jnp.float32)
    wb = 0.1 * jax.random.normal(k[2], (C, text_dim), jnp.float32)
    bb = 0.1 * jax.random.normal(k[3], (C,), jnp.float32)
    params = dict(wg=wg, bg=bg, wb=wb, bb=bb)

    x = jax.random.normal(k[4], (B, C, H, W), jnp.float32)      # feature_map (NCHW)
    text = jax.random.normal(k[5], (B, text_dim), jnp.float32)  # text_feature

    out = jax.block_until_ready(film_forward(x, text, params))
    ref = jax.block_until_ready(ref_forward(x, text, params))

    assert out.shape == (B, C, H, W)
    assert jnp.allclose(out, ref, rtol=1e-5, atol=1e-5), "mismatch vs. JAX reference"

    # bf16 feature-map path (dtype-aware tiling, same kernel).
    out_bf16 = jax.block_until_ready(
        film_forward(x.astype(jnp.bfloat16), text, params))
    ref_bf16 = ref_forward(x.astype(jnp.bfloat16), text, params)
    assert out_bf16.dtype == jnp.bfloat16
    assert jnp.allclose(out_bf16.astype(jnp.float32),
                        ref_bf16.astype(jnp.float32), rtol=2e-2, atol=2e-2)

    print("KERNEL_OK")
</pallas_src>

<mosaic_0001>
module attributes {stable_mosaic.version = 11 : i64} {
  func.func @film_kernel(%arg0: i32, %arg1: i32, %arg2: i32, %arg3: memref<1x32x1xf32, #tpu.memory_space<vmem>>, %arg4: memref<1x32x1xf32, #tpu.memory_space<vmem>>, %arg5: memref<1x32x256xf32, #tpu.memory_space<vmem>>, %arg6: memref<1x32x256xf32, #tpu.memory_space<vmem>>) attributes {dimension_semantics = [#tpu.dimension_semantics<parallel>, #tpu.dimension_semantics<parallel>, #tpu.dimension_semantics<parallel>], iteration_bounds = array<i64: 2, 1, 1>, scalar_prefetch = 0 : i64, scratch_operands = 0 : i64, tpu.core_type = #tpu.core_type<tc>, window_params = [{transform_indices = @transform_0, window_bounds = array<i64: 1, 32, 1>}, {transform_indices = @transform_1, window_bounds = array<i64: 1, 32, 1>}, {transform_indices = @transform_2, window_bounds = array<i64: 1, 32, 256>}, {transform_indices = @transform_3, window_bounds = array<i64: 1, 32, 256>}]} {
    %c0 = arith.constant 0 : index
    %c0_0 = arith.constant 0 : index
    %c0_1 = arith.constant 0 : index
    %0 = vector.load %arg5[%c0, %c0_0, %c0_1] : memref<1x32x256xf32, #tpu.memory_space<vmem>>, vector<1x32x256xf32>
    %1 = vector.shape_cast %0 : vector<1x32x256xf32> to vector<32x256xf32>
    %c0_2 = arith.constant 0 : index
    %c0_3 = arith.constant 0 : index
    %c0_4 = arith.constant 0 : index
    %2 = vector.load %arg3[%c0_2, %c0_3, %c0_4] : memref<1x32x1xf32, #tpu.memory_space<vmem>>, vector<1x32x1xf32>
    %3 = vector.shape_cast %2 : vector<1x32x1xf32> to vector<32x1xf32>
    %4 = vector.broadcast %3 : vector<32x1xf32> to vector<32x256xf32>
    %5 = arith.mulf %4, %1 : vector<32x256xf32>
    %c0_5 = arith.constant 0 : index
    %c0_6 = arith.constant 0 : index
    %c0_7 = arith.constant 0 : index
    %6 = vector.load %arg4[%c0_5, %c0_6, %c0_7] : memref<1x32x1xf32, #tpu.memory_space<vmem>>, vector<1x32x1xf32>
    %7 = vector.shape_cast %6 : vector<1x32x1xf32> to vector<32x1xf32>
    %8 = vector.broadcast %7 : vector<32x1xf32> to vector<32x256xf32>
    %9 = arith.addf %5, %8 : vector<32x256xf32>
    %c0_8 = arith.constant 0 : index
    %c0_9 = arith.constant 0 : index
    %c0_10 = arith.constant 0 : index
    %10 = vector.load %arg6[%c0_8, %c0_9, %c0_10] : memref<1x32x256xf32, #tpu.memory_space<vmem>>, vector<1x32x256xf32>
    %11 = vector.shape_cast %10 : vector<1x32x256xf32> to vector<32x256xf32>
    %12 = vector.shape_cast %9 : vector<32x256xf32> to vector<1x32x256xf32>
    tpu.vector_store %arg6[%c0_8, %c0_9, %c0_10], %12 {strides = array<i32>} : memref<1x32x256xf32, #tpu.memory_space<vmem>>, vector<1x32x256xf32>,
    return
  }
  func.func @transform_0(%arg0: i32, %arg1: i32, %arg2: i32) -> (i32, i32, i32) {
    %c0_i32 = arith.constant 0 : i32
    %c0_i32_0 = arith.constant 0 : i32
    return %arg0, %arg1, %c0_i32 : i32, i32, i32
  }
  func.func @transform_1(%arg0: i32, %arg1: i32, %arg2: i32) -> (i32, i32, i32) {
    %c0_i32 = arith.constant 0 : i32
    %c0_i32_0 = arith.constant 0 : i32
    return %arg0, %arg1, %c0_i32 : i32, i32, i32
  }
  func.func @transform_2(%arg0: i32, %arg1: i32, %arg2: i32) -> (i32, i32, i32) {
    %c0_i32 = arith.constant 0 : i32
    return %arg0, %arg1, %arg2 : i32, i32, i32
  }
  func.func @transform_3(%arg0: i32, %arg1: i32, %arg2: i32) -> (i32, i32, i32) {
    %c0_i32 = arith.constant 0 : i32
    return %arg0, %arg1, %arg2 : i32, i32, i32
  }
}

</mosaic_0001>

<llo_original>
// kernel: tpu_custom_call.1
$region0: #{tpu_custom_call.1}
  #allocation0 [shape = 'u32[]', space=smem, size = 0x4, offset = 0x4, fixed_abs, tag = 'smem constant byte address 0x4 - core index']
  #allocation1 [shape = 'u32[144,128]{1,0:T(1,128)}', space=vmem, size = 0x12000, scoped, tag = 'internal scratch']
  %s0 = inlined_call_operand.vmem [shape: f32[2,32,1], index: 0, kind: input, shape index: {}]
  %s1 = inlined_call_operand.vmem [shape: f32[2,32,1], index: 1, kind: input, shape index: {}]
  %s2 = inlined_call_operand.vmem [shape: f32[2,32,256], index: 2, kind: input, shape index: {}]
  %s3 = inlined_call_operand.hbm [shape: f32[2,32,256], index: 3, kind: output, shape index: {}]
  %s4 = sld [smem:[#allocation0]]
  $region45: #{tpu_custom_call.1} parent=0
    _
  %s6 = ssub.s32 1, %s4
  %s7 = scalar_select 0, %s6, %s4
  $region1: #{tpu_custom_call.1} parent=0
    #allocation2 [shape = 'u8[65536]{0}', space=vmem, size = 0x10000, scoped, tag = 'output window, operand 0']
    #allocation3 [shape = 's32[2]{0}', space=sflag, size = 0x8, scoped, tag = 'scoped memory for tpu_custom_call.1']
    %8 = vsyncpa [#allocation3], 0
    %s9 = scalar_lea.sflag [#allocation3], 1
    %10 = vsyncpa %s9, 0
    loop: start=0, step=1, limit=4
    $region2: #{tpu_custom_call.1} parent=1 // loop_pre_header
      _
    $region3: #{tpu_custom_call.1} parent=1 // loop_header
      %s12 = sphi 0, %s16
      %p13 = scmp.ge.s32.totalorder %s12, 4
      %s19 = sphi 0, %s38
      %s20 = sphi 0, %s34
      %s21 = sphi 0, %s30
      %s22 = sphi 0, %s19
      %s23 = sphi 0, %s20
      %s24 = sphi 0, %s21
      %s25 = sphi 0, %s22
      %s26 = sphi 0, %s23
      %s27 = sphi 0, %s24
      %s43 = sphi 0, %s45
      %s46 = sphi 0, %s43
      %s47 = sphi 0, %s46
      %s63 = sphi 0, %s47
      %s71 = sphi 0, %s73
      %s74 = sphi 0, %s71
      %s75 = sphi 0, %s74
      %s91 = sphi 0, %s75
      %s101 = sphi 0, %s103
      %s104 = sphi 0, %s101
      %s105 = sphi 0, %s104
      %s121 = sphi 0, %s105
      %s131 = sphi 0, %s133
      %s134 = sphi 0, %s131
      %s135 = sphi 0, %s134
      %s151 = sphi 0, %s135
    $region4: #{tpu_custom_call.1} parent=1 // loop_header_branch
      %15 = sbr.rel (%p13) target = $region8
    $region5: #{tpu_custom_call.1} parent=1 // loop_body
      %s17 = ssub.s32 %s12, 1
      %s18 = ssub.s32 %s12, 2
      %s28 = sadd.s32 1, %s21
      %p29 = scmp.ge.s32.totalorder %s28, 1
      %s30 = scalar_select %p29, 0, %s28
      %s31 = sadd.s32 1, %s20
      %s32 = scalar_select %p29, %s31, %s20
      %p33 = scmp.ge.s32.totalorder %s32, 1
      %s34 = scalar_select %p33, 0, %s32
      %s35 = sadd.s32 1, %s19
      %s36 = scalar_select %p33, %s35, %s19
      %p37 = scmp.ge.s32.totalorder %s36, 2
      %s38 = scalar_select %p37, 0, %s36
      %s39 = ssub.s32 %s19, %s38
      %s40 = ssub.s32 %s20, %s34
      %s41 = sor.u32 %s39, %s40
      %p42 = scmp.eq.s32.totalorder %s41, 0
      %s44 = sadd.s32 %s43, 1
      %s45 = scalar_select %p42, %s43, %s44
      %p48 = pneg %p42
      %p49 = scmp.eq.s32.totalorder %s12, 1
      %p50 = por %p48, %p49
      %p51 = scmp.ne.s32.totalorder %s43, %s46
      %p52 = scmp.eq.s32.totalorder %s12, 0
      %p53 = por %p51, %p52
      %p54 = scmp.ne.s32.totalorder %s43, %s46
      %p55 = scmp.eq.s32.totalorder %s17, 1
      %p56 = por %p54, %p55
      %p57 = scmp.ne.s32.totalorder %s46, %s47
      %p58 = scmp.eq.s32.totalorder %s17, 0
      %p59 = por %p57, %p58
      %p60 = scmp.ne.s32.totalorder %s46, %s47
      %p61 = scmp.eq.s32.totalorder %s18, 1
      %p62 = por %p60, %p61
      %p64 = scmp.ne.s32.totalorder %s47, %s63
      %p65 = scmp.eq.s32.totalorder %s18, 0
      %p66 = por %p64, %p65
      %s67 = ssub.s32 %s19, %s38
      %s68 = ssub.s32 %s20, %s34
      %s69 = sor.u32 %s67, %s68
      %p70 = scmp.eq.s32.totalorder %s69, 0
      %s72 = sadd.s32 %s71, 1
      %s73 = scalar_select %p70, %s71, %s72
      %p76 = pneg %p70
      %p77 = scmp.eq.s32.totalorder %s12, 1
      %p78 = por %p76, %p77
      %p79 = scmp.ne.s32.totalorder %s71, %s74
      %p80 = scmp.eq.s32.totalorder %s12, 0
      %p81 = por %p79, %p80
      %p82 = scmp.ne.s32.totalorder %s71, %s74
      %p83 = scmp.eq.s32.totalorder %s17, 1
      %p84 = por %p82, %p83
      %p85 = scmp.ne.s32.totalorder %s74, %s75
      %p86 = scmp.eq.s32.totalorder %s17, 0
      %p87 = por %p85, %p86
      %p88 = scmp.ne.s32.totalorder %s74, %s75
      %p89 = scmp.eq.s32.totalorder %s18, 1
      %p90 = por %p88, %p89
      %p92 = scmp.ne.s32.totalorder %s75, %s91
      %p93 = scmp.eq.s32.totalorder %s18, 0
      %p94 = por %p92, %p93
      %s95 = ssub.s32 %s19, %s38
      %s96 = ssub.s32 %s20, %s34
      %s97 = sor.u32 %s95, %s96
      %s98 = ssub.s32 %s21, %s30
      %s99 = sor.u32 %s97, %s98
      %p100 = scmp.eq.s32.totalorder %s99, 0
      %s102 = sadd.s32 %s101, 1
      %s103 = scalar_select %p100, %s101, %s102
      %p106 = pneg %p100
      %p107 = scmp.eq.s32.totalorder %s12, 1
      %p108 = por %p106, %p107
      %p109 = scmp.ne.s32.totalorder %s101, %s104
      %p110 = scmp.eq.s32.totalorder %s12, 0
      %p111 = por %p109, %p110
      %p112 = scmp.ne.s32.totalorder %s101, %s104
      %p113 = scmp.eq.s32.totalorder %s17, 1
      %p114 = por %p112, %p113
      %p115 = scmp.ne.s32.totalorder %s104, %s105
      %p116 = scmp.eq.s32.totalorder %s17, 0
      %p117 = por %p115, %p116
      %p118 = scmp.ne.s32.totalorder %s104, %s105
      %p119 = scmp.eq.s32.totalorder %s18, 1
      %p120 = por %p118, %p119
      %p122 = scmp.ne.s32.totalorder %s105, %s121
      %p123 = scmp.eq.s32.totalorder %s18, 0
      %p124 = por %p122, %p123
      %s125 = ssub.s32 %s19, %s38
      %s126 = ssub.s32 %s20, %s34
      %s127 = sor.u32 %s125, %s126
      %s128 = ssub.s32 %s21, %s30
      %s129 = sor.u32 %s127, %s128
      %p130 = scmp.eq.s32.totalorder %s129, 0
      %s132 = sadd.s32 %s131, 1
      %s133 = scalar_select %p130, %s131, %s132
      %p136 = pneg %p130
      %p137 = scmp.eq.s32.totalorder %s12, 1
      %p138 = por %p136, %p137
      %p139 = scmp.ne.s32.totalorder %s131, %s134
      %p140 = scmp.eq.s32.totalorder %s12, 0
      %p141 = por %p139, %p140
      %p142 = scmp.ne.s32.totalorder %s131, %s134
      %p143 = scmp.eq.s32.totalorder %s17, 1
      %p144 = por %p142, %p143
      %p145 = scmp.ne.s32.totalorder %s134, %s135
      %p146 = scmp.eq.s32.totalorder %s17, 0
      %p147 = por %p145, %p146
      %p148 = scmp.ne.s32.totalorder %s134, %s135
      %p149 = scmp.eq.s32.totalorder %s18, 1
      %p150 = por %p148, %p149
      %p152 = scmp.ne.s32.totalorder %s135, %s151
      %p153 = scmp.eq.s32.totalorder %s18, 0
      %p154 = por %p152, %p153
      %p155 = scmp.le.s32.totalorder 1, %s12
      %p156 = scmp.lt.s32.totalorder %s12, 3
      %p157 = pnand %p155, %p156
      %p158 = pneg %p157
      // Predicated region
      $region9: #{tpu_custom_call.1} parent=5 // pred_check
        _
      $region10: #{tpu_custom_call.1} parent=5 // pred_check_branch
        %160 = sbr.rel (%p157) target = $region12
      $region11: #{tpu_custom_call.1} parent=5 // pred_region
        %s161 = ssub.s32 %s12, 1
      $region12: #{tpu_custom_call.1} parent=5 // pred_fallthru
        _
      %p162 = scmp.lt.s32.totalorder %s12, 2
      // Predicated region
      $region13: #{tpu_custom_call.1} parent=5 // pred_check
        %p163 = pneg %p162
      $region14: #{tpu_custom_call.1} parent=5 // pred_check_branch
        %165 = sbr.rel (%p163) target = $region16
      $region15: #{tpu_custom_call.1} parent=5 // pred_region
        // Predicated region
        $region17: #{tpu_custom_call.1} parent=15 // pred_check
          %p166 = pneg %p53
        $region18: #{tpu_custom_call.1} parent=15 // pred_check_branch
          %168 = sbr.rel (%p166) target = $region20
        $region19: #{tpu_custom_call.1} parent=15 // pred_region
          %s169 = smul.u32 4, %s20
          %p170 = scmp.lt.s32.totalorder %s19, 1
          %s171 = scalar_select %p170, %s19, 1
          %p172 = scmp.lt.s32.totalorder %s169, 3
          %s173 = scalar_select %p172, %s169, 3
          %s174 = smul.addr %s171, 4
          %s175 = sadd.s32 %s173, %s174
          %s176 = smul.addr %s175, 8
          %s177 = scalar_lea.vmem %s0, %s176
          %s178 = smul.u32 4, %s20
        $region20: #{tpu_custom_call.1} parent=15 // pred_fallthru
          _
        // Predicated region
        $region21: #{tpu_custom_call.1} parent=15 // pred_check
          %p179 = pneg %p81
        $region22: #{tpu_custom_call.1} parent=15 // pred_check_branch
          %181 = sbr.rel (%p179) target = $region24
        $region23: #{tpu_custom_call.1} parent=15 // pred_region
          %s182 = smul.u32 4, %s20
          %p183 = scmp.lt.s32.totalorder %s19, 1
          %s184 = scalar_select %p183, %s19, 1
          %p185 = scmp.lt.s32.totalorder %s182, 3
          %s186 = scalar_select %p185, %s182, 3
          %s187 = smul.addr %s184, 4
          %s188 = sadd.s32 %s186, %s187
          %s189 = smul.addr %s188, 8
          %s190 = scalar_lea.vmem %s1, %s189
          %s191 = smul.u32 4, %s20
        $region24: #{tpu_custom_call.1} parent=15 // pred_fallthru
          _
        // Predicated region
        $region25: #{tpu_custom_call.1} parent=15 // pred_check
          %p192 = pneg %p111
        $region26: #{tpu_custom_call.1} parent=15 // pred_check_branch
          %194 = sbr.rel (%p192) target = $region28
        $region27: #{tpu_custom_call.1} parent=15 // pred_region
          %s195 = smul.u32 4, %s20
          %s196 = smul.u32 2, %s21
          %p197 = scmp.lt.s32.totalorder %s19, 1
          %s198 = scalar_select %p197, %s19, 1
          %p199 = scmp.lt.s32.totalorder %s195, 3
          %s200 = scalar_select %p199, %s195, 3
          %p201 = scmp.lt.s32.totalorder %s196, 1
          %s202 = scalar_select %p201, %s196, 1
          %s203 = smul.addr %s200, 2
          %s204 = sadd.s32 %s202, %s203
          %s205 = smul.addr %s198, 8
          %s206 = sadd.s32 %s204, %s205
          %s207 = smul.addr %s206, 8
          %s208 = scalar_lea.vmem %s2, %s207
          %s209 = smul.u32 4, %s20
          %s210 = smul.u32 2, %s21
        $region28: #{tpu_custom_call.1} parent=15 // pred_fallthru
          _
      $region16: #{tpu_custom_call.1} parent=5 // pred_fallthru
        _
      %p211 = scmp.le.s32.totalorder 1, %s12
      %p212 = scmp.lt.s32.totalorder %s12, 3
      %p213 = pnand %p211, %p212
      %p214 = pneg %p213
      // Predicated region
      $region29: #{tpu_custom_call.1} parent=5 // pred_check
        _
      $region30: #{tpu_custom_call.1} parent=5 // pred_check_branch
        %216 = sbr.rel (%p213) target = $region32
      $region31: #{tpu_custom_call.1} parent=5 // pred_region
        %s217 = ssub.s32 %s12, 1
        %s218 = smul.u32 4, %s23
        %p219 = scmp.lt.s32.totalorder %s22, 1
        %s220 = scalar_select %p219, %s22, 1
        %p221 = scmp.lt.s32.totalorder %s218, 3
        %s222 = scalar_select %p221, %s218, 3
        %s223 = smul.addr %s220, 4
        %s224 = sadd.s32 %s222, %s223
        %s225 = smul.addr %s224, 8
        %s226 = scalar_lea.vmem %s0, %s225
        %p227 = pneg %p59
        %p228 = pneg %p56
        %s229 = smul.u32 4, %s23
        %p230 = scmp.lt.s32.totalorder %s22, 1
        %s231 = scalar_select %p230, %s22, 1
        %p232 = scmp.lt.s32.totalorder %s229, 3
        %s233 = scalar_select %p232, %s229, 3
        %s234 = smul.addr %s231, 4
        %s235 = sadd.s32 %s233, %s234
        %s236 = smul.addr %s235, 8
        %s237 = scalar_lea.vmem %s1, %s236
        %p238 = pneg %p87
        %p239 = pneg %p84
        %s240 = smul.u32 4, %s23
        %s241 = smul.u32 2, %s24
        %p242 = scmp.lt.s32.totalorder %s22, 1
        %s243 = scalar_select %p242, %s22, 1
        %p244 = scmp.lt.s32.totalorder %s240, 3
        %s245 = scalar_select %p244, %s240, 3
        %p246 = scmp.lt.s32.totalorder %s241, 1
        %s247 = scalar_select %p246, %s241, 1
        %s248 = smul.addr %s245, 2
        %s249 = sadd.s32 %s247, %s248
        %s250 = smul.addr %s243, 8
        %s251 = sadd.s32 %s249, %s250
        %s252 = smul.addr %s251, 8
        %s253 = scalar_lea.vmem %s2, %s252
        %p254 = pneg %p117
        %p255 = pneg %p114
        %p256 = pneg %p147
        %p257 = pneg %p144
        %s258 = sand.u32 %s134, 1
        %s259 = scalar_lea.sflag [#allocation3], %s258
        %s260 = sand.u32 %s134, 1
        %s261 = smul.addr %s260, 64
        %s262 = scalar_lea.vmem [#allocation2], %s261
        %s263 = smul.u32 4, %s23
        %p264 = scmp.lt.s32.totalorder %s22, 1
        %s265 = scalar_select %p264, %s22, 1
        %p266 = scmp.lt.s32.totalorder %s263, 3
        %s267 = scalar_select %p266, %s263, 3
        %s268 = smul.addr %s265, 4
        %s269 = sadd.s32 %s267, %s268
        %s270 = smul.addr %s269, 8
        %s271 = scalar_lea.vmem %s0, %s270
        %s272 = smul.u32 4, %s23
        %s273 = smul.u32 4, %s23
        %p274 = scmp.lt.s32.totalorder %s22, 1
        %s275 = scalar_select %p274, %s22, 1
        %p276 = scmp.lt.s32.totalorder %s273, 3
        %s277 = scalar_select %p276, %s273, 3
        %s278 = smul.addr %s275, 4
        %s279 = sadd.s32 %s277, %s278
        %s280 = smul.addr %s279, 8
        %s281 = scalar_lea.vmem %s1, %s280
        %s282 = smul.u32 4, %s23
        %s283 = smul.u32 4, %s23
        %s284 = smul.u32 2, %s24
        %p285 = scmp.lt.s32.totalorder %s22, 1
        %s286 = scalar_select %p285, %s22, 1
        %p287 = scmp.lt.s32.totalorder %s283, 3
        %s288 = scalar_select %p287, %s283, 3
        %p289 = scmp.lt.s32.totalorder %s284, 1
        %s290 = scalar_select %p289, %s284, 1
        %s291 = smul.addr %s288, 2
        %s292 = sadd.s32 %s290, %s291
        %s293 = smul.addr %s286, 8
        %s294 = sadd.s32 %s292, %s293
        %s295 = smul.addr %s294, 8
        %s296 = scalar_lea.vmem %s2, %s295
        %s297 = smul.u32 4, %s23
        %s298 = smul.u32 2, %s24
        %s299 = smul.u32 4, %s23
        %s300 = smul.u32 2, %s24
        %v301 = vld [vmem:[%s296] sm:$0xff]
        %v302 = vld [vmem:[%s296 + $0x8] sm:$0xff]
        %v303 = vld [vmem:[%s296 + $0x10] sm:$0xff]
        %v304 = vld [vmem:[%s296 + $0x18] sm:$0xff]
        %v305 = vld [vmem:[%s296 + $0x20] sm:$0xff]
        %v306 = vld [vmem:[%s296 + $0x28] sm:$0xff]
        %v307 = vld [vmem:[%s296 + $0x30] sm:$0xff]
        %v308 = vld [vmem:[%s296 + $0x38] sm:$0xff]
        %v309 = vld [vmem:[%s271] sm:$0xff]
        %v310 = vld [vmem:[%s271 + $0x8] sm:$0xff]
        %v311 = vld [vmem:[%s271 + $0x10] sm:$0xff]
        %v312 = vld [vmem:[%s271 + $0x18] sm:$0xff]
        %314 = vset.pattern.permute.xlu0 0
        %315 = vperm.xlu0 %314, %v309
        %v316 = vpop.permute.xlu0 %315
        %319 = vset.pattern.permute.xlu0 0
        %320 = vperm.xlu0 %319, %v310
        %v321 = vpop.permute.xlu0 %320
        %324 = vset.pattern.permute.xlu0 0
        %325 = vperm.xlu0 %324, %v311
        %v326 = vpop.permute.xlu0 %325
        %329 = vset.pattern.permute.xlu0 0
        %330 = vperm.xlu0 %329, %v312
        %v331 = vpop.permute.xlu0 %330
        %v333 = vmul.f32 %v316, %v301
        %v334 = vmul.f32 %v316, %v302
        %v335 = vmul.f32 %v321, %v303
        %v336 = vmul.f32 %v321, %v304
        %v337 = vmul.f32 %v326, %v305
        %v338 = vmul.f32 %v326, %v306
        %v339 = vmul.f32 %v331, %v307
        %v340 = vmul.f32 %v331, %v308
        %v341 = vld [vmem:[%s281] sm:$0xff]
        %v342 = vld [vmem:[%s281 + $0x8] sm:$0xff]
        %v343 = vld [vmem:[%s281 + $0x10] sm:$0xff]
        %v344 = vld [vmem:[%s281 + $0x18] sm:$0xff]
        %346 = vset.pattern.permute.xlu0 0
        %347 = vperm.xlu0 %346, %v341
        %v348 = vpop.permute.xlu0 %347
        %351 = vset.pattern.permute.xlu0 0
        %352 = vperm.xlu0 %351, %v342
        %v353 = vpop.permute.xlu0 %352
        %356 = vset.pattern.permute.xlu0 0
        %357 = vperm.xlu0 %356, %v343
        %v358 = vpop.permute.xlu0 %357
        %361 = vset.pattern.permute.xlu0 0
        %362 = vperm.xlu0 %361, %v344
        %v363 = vpop.permute.xlu0 %362
        %v365 = vadd.f32 %v333, %v348
        %v366 = vadd.f32 %v334, %v348
        %v367 = vadd.f32 %v335, %v353
        %v368 = vadd.f32 %v336, %v353
        %v369 = vadd.f32 %v337, %v358
        %v370 = vadd.f32 %v338, %v358
        %v371 = vadd.f32 %v339, %v363
        %v372 = vadd.f32 %v340, %v363
        %373 = vst [vmem:[%s262] sm:$0xff] %v365
        %374 = vst [vmem:[%s262 + $0x8] sm:$0xff] %v366
        %375 = vst [vmem:[%s262 + $0x10] sm:$0xff] %v367
        %376 = vst [vmem:[%s262 + $0x18] sm:$0xff] %v368
        %377 = vst [vmem:[%s262 + $0x20] sm:$0xff] %v369
        %378 = vst [vmem:[%s262 + $0x28] sm:$0xff] %v370
        %379 = vst [vmem:[%s262 + $0x30] sm:$0xff] %v371
        %380 = vst [vmem:[%s262 + $0x38] sm:$0xff] %v372
        %s381 = sand.u32 %s134, 1
        %s382 = scalar_lea.sflag [#allocation3], %s381
        %s383 = sand.u32 %s134, 1
        %s384 = smul.addr %s383, 64
        %s385 = scalar_lea.vmem [#allocation2], %s384
        // Predicated region
        $region33: #{tpu_custom_call.1} parent=31 // pred_check
          %p386 = pneg %p144
        $region34: #{tpu_custom_call.1} parent=31 // pred_check_branch
          %388 = sbr.rel (%p386) target = $region36
        $region35: #{tpu_custom_call.1} parent=31 // pred_region
          %s389 = smul.u32 4, %s23
          %s390 = smul.u32 2, %s24
          %s392 = ssub.s32 1024, 1024
          %393 = vsyncadd %s382, %s392
          %s394 = smul.addr %s389, 2
          %s395 = sadd.s32 %s390, %s394
          %s396 = smul.addr %s22, 8
          %s397 = sadd.s32 %s395, %s396
          %s398 = smul.addr %s397, 128
          %s399 = scalar_lea.hbm %s3, %s398
          %s400 = sshll.u32 %s385, 4
          %s401 = int_to_ptr.vmem [resolvable:$true] %s400
          %406 = dma.vmem_to_hbm [thread:$0]  %s401, 1024, %s399, %s382, 256, 256, 16
        $region36: #{tpu_custom_call.1} parent=31 // pred_fallthru
          _
      $region32: #{tpu_custom_call.1} parent=5 // pred_fallthru
        _
      %p407 = scmp.le.s32.totalorder 2, %s12
      // Predicated region
      $region37: #{tpu_custom_call.1} parent=5 // pred_check
        %p408 = pneg %p407
      $region38: #{tpu_custom_call.1} parent=5 // pred_check_branch
        %410 = sbr.rel (%p408) target = $region40
      $region39: #{tpu_custom_call.1} parent=5 // pred_region
        %s411 = ssub.s32 %s12, 2
        // Predicated region
        $region41: #{tpu_custom_call.1} parent=39 // pred_check
          %p412 = pneg %p150
        $region42: #{tpu_custom_call.1} parent=39 // pred_check_branch
          %414 = sbr.rel (%p412) target = $region44
        $region43: #{tpu_custom_call.1} parent=39 // pred_region
          %s415 = sand.u32 %s135, 1
          %s416 = scalar_lea.sflag [#allocation3], %s415
          %s417 = sand.u32 %s135, 1
          %s418 = smul.addr %s417, 64
          %s419 = scalar_lea.vmem [#allocation2], %s418
          %420 = dma.done %s416, 1024
        $region44: #{tpu_custom_call.1} parent=39 // pred_fallthru
          _
      $region40: #{tpu_custom_call.1} parent=5 // pred_fallthru
        _
    $region6: #{tpu_custom_call.1} parent=1 // loop_footer
      %s16 = sadd.s32 1, %s12
    $region7: #{tpu_custom_call.1} parent=1 // loop_footer_branch
      %11 = sbr.rel target = $region3
    $region8: #{tpu_custom_call.1} parent=1 // loop_exit
      _
    %421 = vsyncpa [#allocation3], 1
    %s422 = scalar_lea.sflag [#allocation3], 1
    %423 = vsyncpa %s422, 1

</llo_original>
